<compile_context>
chip_gen: v6e
topology: v6e:2x2x1
jax: 0.10.0
libtpu: 0.0.40
codegen_flags: <defaults>
</compile_context>

<pallas_src>
import functools

import jax
import jax.numpy as jnp
from jax.experimental import pallas as pl
from jax.experimental.pallas import tpu as pltpu


def _round_up(a, b):
    return ((a + b - 1) // b) * b


def _hinge_reg_kernel(a_ref, b_ref, out_ref, acc_ref, *, lam, hinge,
                      n_valid, tile_rows, tiles_per_split, need_mask):
    """Lane-dense hinge-loss reduction over one (tile_rows, 128) slab tile.

    a_ref, b_ref : (tile_rows, 128) VMEM tiles of the flattened minuend /
                   subtrahend slabs (fully dense vregs).
    out_ref      : (1, 8, 128) VMEM block: this split's lam-scaled accumulator.
    acc_ref      : (8, 128) f32 VMEM accumulator (pure VPU adds per step).
    """
    i = pl.program_id(0)   # split index (parallel across TCs on v7x)
    j = pl.program_id(1)   # row-tile within split (serial; carries accumulator)

    @pl.when(j == 0)
    def _():
        acc_ref[...] = jnp.zeros_like(acc_ref)

    d = a_ref[...].astype(jnp.float32) - b_ref[...].astype(jnp.float32)

    if need_mask:
        # Mask padded elements *before* the hinge (exp(0) == 1 would otherwise
        # pollute the sum; stale partial-block data never reaches arithmetic
        # that survives).  hinge(-1e30) == 0 for both 'relu' and 'exp'.
        tile = i * tiles_per_split + j
        row = jax.lax.broadcasted_iota(jnp.int32, d.shape, 0)
        col = jax.lax.broadcasted_iota(jnp.int32, d.shape, 1)
        flat = (tile * tile_rows + row) * 128 + col
        d = jnp.where(flat < n_valid, d, jnp.float32(-1e30))

    if hinge == "relu":
        h = jnp.maximum(d, 0.0)
    elif hinge == "exp":
        h = jnp.exp(d)
    else:
        raise ValueError(f"{hinge} not handled")

    # Fold (tile_rows, 128) -> (8, 128): free leading-axis reshape + vreg adds
    # (no cross-lane / XLU work in the steady state).
    acc_ref[...] += jnp.sum(h.reshape(tile_rows // 8, 8, 128), axis=0)

    @pl.when(j == pl.num_programs(1) - 1)
    def _():
        out_ref[0] = acc_ref[...] * lam   # final cross-lane sum done in wrapper


@functools.partial(
    jax.jit, static_argnames=("constant", "hinge_loss_fn_name", "tile_rows_hint"))
def hinge_loss_regularizer(f_x1, f_x2, *, constant, hinge_loss_fn_name,
                           tile_rows_hint=None):
    """Pallas implementation of HingeLossRegularizer.forward -> scalar f32."""
    if hinge_loss_fn_name not in ("relu", "exp"):
        raise ValueError(f"{hinge_loss_fn_name} not handled")
    assert f_x1.shape == f_x2.shape and f_x1.ndim == 2
    n, c = f_x1.shape
    assert c >= 2

    # ---- lane-dense repack (only the 2 needed columns; native dtype) -------
    #   u - v == concat(f_x1[:,1] - f_x2[:,1], f_x2[:,0] - f_x1[:,0])
    u = jnp.concatenate([f_x1[:, 1], f_x2[:, 0]])
    v = jnp.concatenate([f_x2[:, 1], f_x1[:, 0]])
    n_valid = 2 * n
    total = _round_up(n_valid, 16 * 128)   # whole (16,128) tiles for any dtype
    if total != n_valid:
        u = jnp.pad(u, (0, total - n_valid))
        v = jnp.pad(v, (0, total - n_valid))
    rows = total // 128
    a2 = u.reshape(rows, 128)
    b2 = v.reshape(rows, 128)

    # ---- tile sizing (lane-padded footprint; every byte useful) ------------
    isz = jnp.dtype(a2.dtype).itemsize
    vmem_budget = 10 * 1024 * 1024                 # 2 inputs x 2 pipeline bufs
    tr_cap = vmem_budget // (2 * 2 * 128 * isz)
    tr_target = (2 * 1024 * 1024) // (128 * isz)   # ~2 MiB / input / grid step
    candidates = [tr_target, tr_cap, rows]
    if tile_rows_hint is not None:
        candidates.append(int(tile_rows_hint))
    tr = max(16, (min(candidates) // 16) * 16)

    num_tiles = pl.cdiv(rows, tr)
    # 2-way split feeds both TensorCores on v7x; harmless (serial) elsewhere.
    nsplit = 2 if (num_tiles >= 2 and num_tiles % 2 == 0) else 1
    tps = pl.cdiv(num_tiles, nsplit)
    need_mask = (nsplit * tps * tr * 128) != n_valid

    idx = lambda i, j: (i * tps + j, 0)

    kernel = functools.partial(
        _hinge_reg_kernel,
        lam=float(constant),
        hinge=hinge_loss_fn_name,
        n_valid=n_valid,
        tile_rows=tr,
        tiles_per_split=tps,
        need_mask=need_mask,
    )

    cost = pl.CostEstimate(
        flops=2 * n_valid,
        transcendentals=(n_valid if hinge_loss_fn_name == "exp" else 0),
        bytes_accessed=2 * total * isz + nsplit * 8 * 128 * 4,
    )

    partials = pl.pallas_call(
        kernel,
        out_shape=jax.ShapeDtypeStruct((nsplit, 8, 128), jnp.float32),
        grid_spec=pltpu.PrefetchScalarGridSpec(
            num_scalar_prefetch=0,
            grid=(nsplit, tps),
            in_specs=[
                pl.BlockSpec((tr, 128), idx),
                pl.BlockSpec((tr, 128), idx),
            ],
            out_specs=pl.BlockSpec((1, 8, 128), lambda i, j: (i, 0, 0)),
            scratch_shapes=[pltpu.VMEM((8, 128), jnp.float32)],
        ),
        compiler_params=pltpu.CompilerParams(
            # The tile axis carries the accumulator -> serial; split axis is
            # independent -> parallel (sharded across TCs on v7x).
            dimension_semantics=("parallel", "arbitrary"),
        ),
        cost_estimate=cost,
    )(a2, b2)

    # Tiny final cross-lane reduce over the lam-scaled per-split accumulators.
    return jnp.sum(partials)


def _reference(f_x1, f_x2, constant, hinge_loss_fn_name):
    fn = (lambda x: jnp.maximum(x, 0.0)) if hinge_loss_fn_name == "relu" else jnp.exp
    diff = jnp.sum(fn(f_x1[:, 1] - f_x2[:, 1])) + jnp.sum(fn(f_x2[:, 0] - f_x1[:, 0]))
    return diff * constant


if __name__ == "__main__":
    key = jax.random.PRNGKey(0)
    k1, k2, k3, k4, k5, k6 = jax.random.split(key, 6)

    lam = 0.1
    ok = True

    def check(x1, x2, hinge_name, tag, **kw):
        global ok
        out = hinge_loss_regularizer(
            x1, x2, constant=lam, hinge_loss_fn_name=hinge_name, **kw)
        out = jax.block_until_ready(out)
        ref = _reference(x1, x2, lam, hinge_name)
        if not jnp.allclose(out, ref, rtol=1e-5, atol=1e-4):
            ok = False
            print(f"MISMATCH ({hinge_name}, {tag}): kernel={out} ref={ref}")

    # (batch, num_model_outputs) with >= 2 columns — aligned batch.
    N, C = 16, 4
    f_x1 = jax.random.normal(k1, (N, C), dtype=jnp.float32)
    f_x2 = jax.random.normal(k2, (N, C), dtype=jnp.float32)
    for hinge_name in ("relu", "exp"):
        check(f_x1, f_x2, hinge_name, f"N={N}")

    # Ragged batch (exercises in-kernel tail masking of the padded slab).
    Nr = 13
    g_x1 = jax.random.normal(k3, (Nr, C), dtype=jnp.float32)
    g_x2 = jax.random.normal(k4, (Nr, C), dtype=jnp.float32)
    for hinge_name in ("relu", "exp"):
        check(g_x1, g_x2, hinge_name, f"N={Nr}")

    # Multi-tile + 2-way core split (tile_rows_hint forces several row tiles),
    # and a serial odd-tile-count case — both exercise the accumulator carry.
    Nm = 1500
    h_x1 = jax.random.normal(k5, (Nm, C), dtype=jnp.float32)
    h_x2 = jax.random.normal(k6, (Nm, C), dtype=jnp.float32)
    for hinge_name in ("relu", "exp"):
        check(h_x1, h_x2, hinge_name, f"N={Nm} split", tile_rows_hint=16)
    check(h_x1[:1200], h_x2[:1200], "exp", "N=1200 serial", tile_rows_hint=16)

    if ok:
        print("KERNEL_OK")
</pallas_src>

<mosaic_0001>
module attributes {stable_mosaic.version = 11 : i64} {
  func.func @_hinge_reg_kernel(%arg0: i32, %arg1: i32, %arg2: memref<16x128xf32, #tpu.memory_space<vmem>>, %arg3: memref<16x128xf32, #tpu.memory_space<vmem>>, %arg4: memref<1x8x128xf32, #tpu.memory_space<vmem>>, %arg5: memref<8x128xf32, #tpu.memory_space<vmem>>) attributes {dimension_semantics = [#tpu.dimension_semantics<parallel>, #tpu.dimension_semantics<arbitrary>], iteration_bounds = array<i64: 1, 1>, scalar_prefetch = 0 : i64, scratch_operands = 1 : i64, tpu.core_type = #tpu.core_type<tc>, window_params = [{transform_indices = @transform_0, window_bounds = array<i64: 16, 128>}, {transform_indices = @transform_1, window_bounds = array<i64: 16, 128>}, {transform_indices = @transform_2, window_bounds = array<i64: 1, 8, 128>}]} {
    %c0_i32 = arith.constant 0 : i32
    %0 = arith.cmpi eq, %arg1, %c0_i32 : i32
    %1 = arith.extui %0 : i1 to i32
    %c0_i32_0 = arith.constant 0 : i32
    %2 = arith.cmpi ne, %1, %c0_i32_0 : i32
    scf.if %2 {
      %cst_12 = arith.constant 0.000000e+00 : f32
      %30 = vector.broadcast %cst_12 : f32 to vector<8x128xf32>
      %c0_13 = arith.constant 0 : index
      %c0_14 = arith.constant 0 : index
      %31 = vector.load %arg5[%c0_13, %c0_14] : memref<8x128xf32, #tpu.memory_space<vmem>>, vector<8x128xf32>
      tpu.vector_store %arg5[%c0_13, %c0_14], %30 {strides = array<i32>} : memref<8x128xf32, #tpu.memory_space<vmem>>, vector<8x128xf32>,
    } else {
    }
    %c0 = arith.constant 0 : index
    %c0_1 = arith.constant 0 : index
    %3 = vector.load %arg2[%c0, %c0_1] : memref<16x128xf32, #tpu.memory_space<vmem>>, vector<16x128xf32>
    %c0_2 = arith.constant 0 : index
    %c0_3 = arith.constant 0 : index
    %4 = vector.load %arg3[%c0_2, %c0_3] : memref<16x128xf32, #tpu.memory_space<vmem>>, vector<16x128xf32>
    %5 = arith.subf %3, %4 : vector<16x128xf32>
    %c1_i32 = arith.constant 1 : i32
    %6 = arith.muli %arg0, %c1_i32 : i32
    %7 = arith.addi %6, %arg1 : i32
    %8 = tpu.iota {dimensions = array<i32: 0>} : vector<16x128xi32>
    %9 = tpu.iota {dimensions = array<i32: 1>} : vector<16x128xi32>
    %c16_i32 = arith.constant 16 : i32
    %10 = arith.muli %7, %c16_i32 : i32
    %11 = vector.broadcast %10 : i32 to vector<16x128xi32>
    %12 = arith.addi %11, %8 : vector<16x128xi32>
    %c128_i32 = arith.constant 128 : i32
    %13 = vector.broadcast %c128_i32 : i32 to vector<16x128xi32>
    %14 = arith.muli %12, %13 : vector<16x128xi32>
    %15 = arith.addi %14, %9 : vector<16x128xi32>
    %c32_i32 = arith.constant 32 : i32
    %16 = vector.broadcast %c32_i32 : i32 to vector<16x128xi32>
    %17 = arith.cmpi slt, %15, %16 : vector<16x128xi32>
    %cst = arith.constant -1.000000e+30 : f32
    %18 = vector.broadcast %cst : f32 to vector<16x128xf32>
    %19 = arith.select %17, %5, %18 : vector<16x128xi1>, vector<16x128xf32>
    %cst_4 = arith.constant 0.000000e+00 : f32
    %20 = vector.broadcast %cst_4 : f32 to vector<16x128xf32>
    %21 = arith.maximumf %19, %20 : vector<16x128xf32>
    %c0_5 = arith.constant 0 : index
    %c0_6 = arith.constant 0 : index
    %22 = vector.load %arg5[%c0_5, %c0_6] : memref<8x128xf32, #tpu.memory_space<vmem>>, vector<8x128xf32>
    %23 = vector.shape_cast %21 : vector<16x128xf32> to vector<2x8x128xf32>
    %cst_7 = arith.constant dense<0.000000e+00> : vector<8x128xf32>
    %24 = vector.multi_reduction <add>, %23, %cst_7 [0] : vector<2x8x128xf32> to vector<8x128xf32>
    %25 = arith.addf %22, %24 : vector<8x128xf32>
    %c0_8 = arith.constant 0 : index
    %c0_9 = arith.constant 0 : index
    %26 = vector.load %arg5[%c0_8, %c0_9] : memref<8x128xf32, #tpu.memory_space<vmem>>, vector<8x128xf32>
    tpu.vector_store %arg5[%c0_8, %c0_9], %25 {strides = array<i32>} : memref<8x128xf32, #tpu.memory_space<vmem>>, vector<8x128xf32>,
    %c0_i32_10 = arith.constant 0 : i32
    %27 = arith.cmpi eq, %arg1, %c0_i32_10 : i32
    %28 = arith.extui %27 : i1 to i32
    %c0_i32_11 = arith.constant 0 : i32
    %29 = arith.cmpi ne, %28, %c0_i32_11 : i32
    scf.if %29 {
      %c0_12 = arith.constant 0 : index
      %c0_13 = arith.constant 0 : index
      %30 = vector.load %arg5[%c0_12, %c0_13] : memref<8x128xf32, #tpu.memory_space<vmem>>, vector<8x128xf32>
      %cst_14 = arith.constant 1.000000e-01 : f32
      %31 = vector.broadcast %cst_14 : f32 to vector<8x128xf32>
      %32 = arith.mulf %30, %31 : vector<8x128xf32>
      %c0_15 = arith.constant 0 : index
      %c0_16 = arith.constant 0 : index
      %c0_17 = arith.constant 0 : index
      %33 = vector.load %arg4[%c0_15, %c0_16, %c0_17] : memref<1x8x128xf32, #tpu.memory_space<vmem>>, vector<1x8x128xf32>
      %34 = vector.shape_cast %33 : vector<1x8x128xf32> to vector<8x128xf32>
      %35 = vector.shape_cast %32 : vector<8x128xf32> to vector<1x8x128xf32>
      tpu.vector_store %arg4[%c0_15, %c0_16, %c0_17], %35 {strides = array<i32>} : memref<1x8x128xf32, #tpu.memory_space<vmem>>, vector<1x8x128xf32>,
    } else {
    }
    return
  }
  func.func @transform_0(%arg0: i32, %arg1: i32) -> (i32, i32) {
    %c1_i32 = arith.constant 1 : i32
    %0 = arith.muli %arg0, %c1_i32 : i32
    %1 = arith.addi %0, %arg1 : i32
    %c0_i32 = arith.constant 0 : i32
    %c0_i32_0 = arith.constant 0 : i32
    return %1, %c0_i32 : i32, i32
  }
  func.func @transform_1(%arg0: i32, %arg1: i32) -> (i32, i32) {
    %c1_i32 = arith.constant 1 : i32
    %0 = arith.muli %arg0, %c1_i32 : i32
    %1 = arith.addi %0, %arg1 : i32
    %c0_i32 = arith.constant 0 : i32
    %c0_i32_0 = arith.constant 0 : i32
    return %1, %c0_i32 : i32, i32
  }
  func.func @transform_2(%arg0: i32, %arg1: i32) -> (i32, i32, i32) {
    %c0_i32 = arith.constant 0 : i32
    %c0_i32_0 = arith.constant 0 : i32
    %c0_i32_1 = arith.constant 0 : i32
    return %arg0, %c0_i32, %c0_i32_0 : i32, i32, i32
  }
}

</mosaic_0001>

<llo_original>
// kernel: hinge_loss_regularizer.1
$region0: #{hinge_loss_regularizer.1}
  #allocation0 [shape = 'u32[]', space=smem, size = 0x4, offset = 0x4, fixed_abs, tag = 'smem constant byte address 0x4 - core index']
  #allocation1 [shape = 'u32[144,128]{1,0:T(1,128)}', space=vmem, size = 0x12000, scoped, tag = 'internal scratch']
  #allocation2 [shape = 'f32[8,128]{1,0:T(8,128)}', space=vmem, size = 0x1000, scoped, tag = 'scratch operand']
  %s0 = inlined_call_operand.vmem [shape: f32[16,128], index: 0, kind: input, shape index: {}]
  %s1 = inlined_call_operand.vmem [shape: f32[16,128], index: 1, kind: input, shape index: {}]
  %s2 = inlined_call_operand.vmem [shape: f32[1,8,128], index: 2, kind: output, shape index: {}]
  %s3 = sld [smem:[#allocation0]]
  $region26: #{hinge_loss_regularizer.1} parent=0
    _
  %s5 = ssub.s32 1, %s3
  %s6 = scalar_select 0, %s5, %s3
  // Predicated region
  $region2: #{hinge_loss_regularizer.1} parent=0 // pred_check
    _
  $region3: #{hinge_loss_regularizer.1} parent=0 // pred_check_branch
    %8 = sbr.rel (0) target = $region5
  $region4: #{hinge_loss_regularizer.1} parent=0 // pred_region
    %s9 = sadd.s32 0, 0
    %s10 = smul.u32 2, %s9
    %p11 = scmp.lt.s32.totalorder %s10, 1
    %s12 = scalar_select %p11, %s10, 1
    %s13 = smul.addr %s12, 8
    %s14 = scalar_lea.vmem %s0, %s13
    %s15 = sadd.s32 0, 0
    %s16 = smul.u32 2, %s15
  $region5: #{hinge_loss_regularizer.1} parent=0 // pred_fallthru
    _
  // Predicated region
  $region6: #{hinge_loss_regularizer.1} parent=0 // pred_check
    _
  $region7: #{hinge_loss_regularizer.1} parent=0 // pred_check_branch
    %18 = sbr.rel (0) target = $region9
  $region8: #{hinge_loss_regularizer.1} parent=0 // pred_region
    %s19 = sadd.s32 0, 0
    %s20 = smul.u32 2, %s19
    %p21 = scmp.lt.s32.totalorder %s20, 1
    %s22 = scalar_select %p21, %s20, 1
    %s23 = smul.addr %s22, 8
    %s24 = scalar_lea.vmem %s1, %s23
    %s25 = sadd.s32 0, 0
    %s26 = smul.u32 2, %s25
  $region9: #{hinge_loss_regularizer.1} parent=0 // pred_fallthru
    _
  %s27 = sadd.s32 0, 0
  %s28 = smul.u32 2, %s27
  %p29 = scmp.lt.s32.totalorder %s28, 1
  %s30 = scalar_select %p29, %s28, 1
  %s31 = smul.addr %s30, 8
  %s32 = scalar_lea.vmem %s0, %s31
  %s33 = sadd.s32 0, 0
  %s34 = smul.u32 2, %s33
  %p35 = scmp.lt.s32.totalorder %s34, 1
  %s36 = scalar_select %p35, %s34, 1
  %s37 = smul.addr %s36, 8
  %s38 = scalar_lea.vmem %s1, %s37
  %s39 = sadd.s32 0, 0
  %s40 = smul.u32 2, %s39
  %p41 = scmp.lt.s32.totalorder %s40, 1
  %s42 = scalar_select %p41, %s40, 1
  %s43 = smul.addr %s42, 8
  %s44 = scalar_lea.vmem %s0, %s43
  %s45 = sadd.s32 0, 0
  %s46 = smul.u32 2, %s45
  %s47 = sadd.s32 0, 0
  %s48 = smul.u32 2, %s47
  %p49 = scmp.lt.s32.totalorder %s48, 1
  %s50 = scalar_select %p49, %s48, 1
  %s51 = smul.addr %s50, 8
  %s52 = scalar_lea.vmem %s1, %s51
  %s53 = sadd.s32 0, 0
  %s54 = smul.u32 2, %s53
  %p55 = scmp.eq.s32.totalorder 0, 0
  // Predicated region
  $region10: #{hinge_loss_regularizer.1} parent=0 // pred_check
    %p56 = pneg %p55
  $region11: #{hinge_loss_regularizer.1} parent=0 // pred_check_branch
    %58 = sbr.rel (%p56) target = $region13
  $region12: #{hinge_loss_regularizer.1} parent=0 // pred_region
    %59 = vst [vmem:[#allocation2] sm:$0xff] 0.0
  $region13: #{hinge_loss_regularizer.1} parent=0 // pred_fallthru
    _
  %v60 = vld [vmem:[%s44] sm:$0xff]
  %v61 = vld [vmem:[%s44 + $0x8] sm:$0xff]
  %v62 = vld [vmem:[%s52] sm:$0xff]
  %v63 = vld [vmem:[%s52 + $0x8] sm:$0xff]
  %v64 = vsub.f32 %v60, %v62
  %v65 = vsub.f32 %v61, %v63
  %s66 = sadd.s32 0, 0
  %v67 = vlaneseq
  %v68 = vshrl.u32 %v67, 7
  %v69 = vadd.s32 %v68, 8
  %v70 = vlaneseq
  %v71 = vand.u32 %v70, 127
  %s72 = smul.u32 %s66, 16
  %v73 = vstv %s72
  %v74 = vadd.s32 %v73, %v68
  %v75 = vadd.s32 %v73, %v69
  %v76 = vmul.u32 %v74, 128
  %v77 = vmul.u32 %v75, 128
  %v78 = vadd.s32 %v76, %v71
  %v79 = vadd.s32 %v77, %v71
  %vm80 = vcmp.lt.s32.totalorder %v78, 32
  %vm81 = vcmp.lt.s32.totalorder %v79, 32
  %v82 = vsel %vm80, %v64, -1e+30
  %v83 = vsel %vm81, %v65, -1e+30
  %v84 = vmax.f32 %v82, 0.0
  %v85 = vmax.f32 %v83, 0.0
  %v86 = vld [vmem:[#allocation2] sm:$0xff]
  %v87 = vadd.f32 %v84, %v85
  %v88 = vadd.f32 %v86, %v87
  %89 = vst [vmem:[#allocation2] sm:$0xff] %v88
  // Predicated region
  $region14: #{hinge_loss_regularizer.1} parent=0 // pred_check
    %p90 = pneg %p55
  $region15: #{hinge_loss_regularizer.1} parent=0 // pred_check_branch
    %92 = sbr.rel (%p90) target = $region17
  $region16: #{hinge_loss_regularizer.1} parent=0 // pred_region
    %v93 = vld [vmem:[#allocation2] sm:$0xff]
    %v94 = vmul.f32 %v93, 0.1
    %95 = vst [vmem:[%s2] sm:$0xff] %v94
  $region17: #{hinge_loss_regularizer.1} parent=0 // pred_fallthru
    _
  // Predicated region
  $region18: #{hinge_loss_regularizer.1} parent=0 // pred_check
    _
  $region19: #{hinge_loss_regularizer.1} parent=0 // pred_check_branch
    %97 = sbr.rel (0) target = $region21
  $region20: #{hinge_loss_regularizer.1} parent=0 // pred_region
    _
  $region21: #{hinge_loss_regularizer.1} parent=0 // pred_fallthru
    _
  // Predicated region
  $region22: #{hinge_loss_regularizer.1} parent=0 // pred_check
    _
  $region23: #{hinge_loss_regularizer.1} parent=0 // pred_check_branch
    %99 = sbr.rel (0) target = $region25
  $region24: #{hinge_loss_regularizer.1} parent=0 // pred_region
    _
  $region25: #{hinge_loss_regularizer.1} parent=0 // pred_fallthru
    _

</llo_original>
